<compile_context>
chip_gen: v5e
topology: v5e:2x2
jax: 0.10.0
libtpu: 0.0.40
codegen_flags: <defaults>
</compile_context>

<pallas_src>
import functools
import math

import jax
import jax.numpy as jnp
from jax.experimental import pallas as pl
from jax.experimental.pallas import tpu as pltpu


def _neg_entropy_kernel(x_ref, o_ref, acc_ref, *,
                        n_valid_b, n_valid_n, b_tile, t_lane,
                        mask_b, mask_n):
    """Accumulates per-(row, lane) sum_c(p*log p); per-batch-tile partial out."""
    bb = pl.program_id(0)            # batch-tile index ("parallel")
    j = pl.program_id(1)             # lane-tile index ("arbitrary", reduction)

    @pl.when(j == 0)
    def _():
        acc_ref[...] = jnp.zeros_like(acc_ref)

    x = x_ref[...].astype(jnp.float32)                  # (b_tile, C, t_lane)

    # Numerically stable: sum_c p*logp = (sum_c e^{x-m}*(x-m)) / s - log(s)
    m = jnp.max(x, axis=1, keepdims=True)               # (b_tile, 1, t_lane)
    xs = x - m
    ex = jnp.exp(xs)
    s = jnp.sum(ex, axis=1, keepdims=True)              # (b_tile, 1, t_lane)
    num = jnp.sum(ex * xs, axis=1, keepdims=True)       # (b_tile, 1, t_lane)
    # One (approx, EUP) reciprocal + one log per spatial position.
    contrib = num * pl.reciprocal(s, approx=True) - jnp.log(s)

    if mask_n:   # static: only emitted when N is not a multiple of t_lane
        col = j * t_lane + jax.lax.broadcasted_iota(jnp.int32, contrib.shape, 2)
        contrib = jnp.where(col < n_valid_n, contrib, 0.0)

    acc_ref[...] += contrib                             # pure VPU adds

    @pl.when(j == pl.num_programs(1) - 1)
    def _():
        if mask_b:   # static: only emitted when B is not a multiple of b_tile
            row_tot = jnp.sum(acc_ref[...], axis=2)     # (b_tile, 1)
            ridx = bb * b_tile + jax.lax.broadcasted_iota(
                jnp.int32, (b_tile, 1), 0)
            row_tot = jnp.where(ridx < n_valid_b, row_tot, 0.0)
            total = jnp.sum(row_tot)
        else:
            total = jnp.sum(acc_ref[...])               # single cross-lane reduce
        # Lane-dense (1, 8, 128) partial-sum block; host reads [bb, 0, 0].
        o_ref[...] = jnp.full((1, 8, 128), total, jnp.float32)


def neg_entropy_loss(x, *, target_block_elems=512 * 1024,
                     vmem_limit_bytes=32 * 1024 * 1024):
    """Pallas implementation of Neg_Entropy_Loss.forward (softmax over dim 1)."""
    total_elems = x.size                  # torch b.mean() divides by full numel
    B, C = x.shape[0], x.shape[1]
    N = math.prod(x.shape[2:]) if x.ndim > 2 else 1

    # Free reshape; no transpose, no pad, no extra HBM pass. Keep caller dtype
    # (bf16 halves HBM bytes; math is done in f32 in VMEM).
    x3 = x.reshape(B, C, N)

    # Block sizing: ~target_block_elems input elements per grid step
    # (~2 MiB f32 / ~1 MiB bf16 -> ~10-13 MiB VMEM incl. f32 temporaries and
    # double buffering; safe on v5e/v6e/v7x with the explicit vmem limit).
    # Lane tile = full spatial extent when it fits, otherwise the largest
    # multiple of 128 within budget; the remaining budget goes to batch rows.
    # Ragged tails are masked in-kernel, never padded in HBM.
    target = max(int(target_block_elems), 128 * C)
    if C * N <= target:
        t_lane = N
    else:
        t_lane = max(128, ((target // C) // 128) * 128)
        if t_lane >= N:
            t_lane = N
    b_tile = int(max(1, min(B, target // max(1, C * t_lane))))
    n_lane_tiles = pl.cdiv(N, t_lane)
    n_b_tiles = pl.cdiv(B, b_tile)
    mask_n = (N % t_lane) != 0
    mask_b = (B % b_tile) != 0

    kernel = functools.partial(
        _neg_entropy_kernel,
        n_valid_b=B, n_valid_n=N, b_tile=b_tile, t_lane=t_lane,
        mask_b=mask_b, mask_n=mask_n)

    partials = pl.pallas_call(
        kernel,
        out_shape=jax.ShapeDtypeStruct((n_b_tiles, 8, 128), jnp.float32),
        grid_spec=pltpu.PrefetchScalarGridSpec(
            num_scalar_prefetch=0,
            grid=(n_b_tiles, n_lane_tiles),
            in_specs=[pl.BlockSpec((b_tile, C, t_lane),
                                   lambda bb, j: (bb, 0, j))],
            out_specs=pl.BlockSpec((1, 8, 128), lambda bb, j: (bb, 0, 0)),
            scratch_shapes=[pltpu.VMEM((b_tile, 1, t_lane), jnp.float32)],
        ),
        compiler_params=pltpu.CompilerParams(
            # Batch tiles are independent (per-tile partial outputs, scratch
            # reset at j==0), so the leading axis may be split across the two
            # v7x TensorCores; the lane axis is the in-tile reduction.
            dimension_semantics=("parallel", "arbitrary"),
            vmem_limit_bytes=vmem_limit_bytes,
        ),
    )(x3)

    # -sum / numel, finished with one trivial XLA reduce outside the kernel.
    return jnp.float32(-1.0 / total_elems) * jnp.sum(partials[:, 0, 0])


def _reference(x):
    logits = x.astype(jnp.float32)
    logp = jax.nn.log_softmax(logits, axis=1)
    p = jax.nn.softmax(logits, axis=1)
    return -jnp.mean(p * logp)


def _check(x, **kw):
    out = jax.block_until_ready(neg_entropy_loss(x, **kw))
    ref = _reference(x)
    # approx reciprocal (EUP) leaves ~1e-4-level relative error on the loss.
    assert jnp.allclose(out, ref, atol=1e-3, rtol=1e-3), (out, ref)


if __name__ == "__main__":
    key = jax.random.PRNGKey(0)
    k1, k2, k3, k4, k5 = jax.random.split(key, 5)

    # Small NCHW input, softmax over dim=1 (channels), as the module uses it.
    _check(jax.random.normal(k1, (2, 4, 16, 16), dtype=jnp.float32))

    # 5-D case matching Encoder: S has shape (b, dl, 3, ps, ps), softmax over dl.
    _check(jax.random.normal(k2, (2, 16, 3, 8, 8), dtype=jnp.float32))

    # bf16 HBM input (halved bytes; in-kernel f32 math).
    _check(jax.random.normal(k3, (2, 8, 16, 16), dtype=jnp.bfloat16))

    # Ragged batch tail (b_tile=2 over B=3) -> exercises the batch mask path.
    _check(jax.random.normal(k4, (3, 4, 8, 16), dtype=jnp.float32),
           target_block_elems=1024)

    # Ragged lane tail (t_lane=256 over N=400) -> exercises the lane mask path.
    _check(jax.random.normal(k5, (2, 4, 4, 100), dtype=jnp.float32),
           target_block_elems=1024)

    print("KERNEL_OK")
</pallas_src>

<mosaic_0001>
module attributes {stable_mosaic.version = 11 : i64} {
  func.func @_neg_entropy_kernel(%arg0: i32, %arg1: i32, %arg2: memref<2x4x256xf32, #tpu.memory_space<vmem>>, %arg3: memref<1x8x128xf32, #tpu.memory_space<vmem>>, %arg4: memref<2x1x256xf32, #tpu.memory_space<vmem>>) attributes {dimension_semantics = [#tpu.dimension_semantics<parallel>, #tpu.dimension_semantics<arbitrary>], iteration_bounds = array<i64: 1, 1>, scalar_prefetch = 0 : i64, scratch_operands = 1 : i64, tpu.core_type = #tpu.core_type<tc>, window_params = [{transform_indices = @transform_0, window_bounds = array<i64: 2, 4, 256>}, {transform_indices = @transform_1, window_bounds = array<i64: 1, 8, 128>}]} {
    %c0_i32 = arith.constant 0 : i32
    %0 = arith.cmpi eq, %arg1, %c0_i32 : i32
    %1 = arith.extui %0 : i1 to i32
    %c0_i32_0 = arith.constant 0 : i32
    %2 = arith.cmpi ne, %1, %c0_i32_0 : i32
    scf.if %2 {
      %cst_13 = arith.constant 0.000000e+00 : f32
      %24 = vector.broadcast %cst_13 : f32 to vector<2x1x256xf32>
      %c0_14 = arith.constant 0 : index
      %c0_15 = arith.constant 0 : index
      %c0_16 = arith.constant 0 : index
      %25 = vector.load %arg4[%c0_14, %c0_15, %c0_16] : memref<2x1x256xf32, #tpu.memory_space<vmem>>, vector<2x1x256xf32>
      tpu.vector_store %arg4[%c0_14, %c0_15, %c0_16], %24 {strides = array<i32>} : memref<2x1x256xf32, #tpu.memory_space<vmem>>, vector<2x1x256xf32>,
    } else {
    }
    %c0 = arith.constant 0 : index
    %c0_1 = arith.constant 0 : index
    %c0_2 = arith.constant 0 : index
    %3 = vector.load %arg2[%c0, %c0_1, %c0_2] : memref<2x4x256xf32, #tpu.memory_space<vmem>>, vector<2x4x256xf32>
    %cst = arith.constant dense<0xFF800000> : vector<2x256xf32>
    %4 = vector.multi_reduction <maximumf>, %3, %cst [1] : vector<2x4x256xf32> to vector<2x256xf32>
    %5 = vector.shape_cast %4 : vector<2x256xf32> to vector<2x1x256xf32>
    %6 = vector.broadcast %5 : vector<2x1x256xf32> to vector<2x4x256xf32>
    %7 = arith.subf %3, %6 : vector<2x4x256xf32>
    %8 = math.exp %7 : vector<2x4x256xf32>
    %cst_3 = arith.constant dense<0.000000e+00> : vector<2x256xf32>
    %9 = vector.multi_reduction <add>, %8, %cst_3 [1] : vector<2x4x256xf32> to vector<2x256xf32>
    %10 = vector.shape_cast %9 : vector<2x256xf32> to vector<2x1x256xf32>
    %11 = arith.mulf %8, %7 : vector<2x4x256xf32>
    %cst_4 = arith.constant dense<0.000000e+00> : vector<2x256xf32>
    %12 = vector.multi_reduction <add>, %11, %cst_4 [1] : vector<2x4x256xf32> to vector<2x256xf32>
    %13 = vector.shape_cast %12 : vector<2x256xf32> to vector<2x1x256xf32>
    %14 = tpu.reciprocal %10 {approx = true} : vector<2x1x256xf32> -> vector<2x1x256xf32>
    %15 = arith.mulf %13, %14 : vector<2x1x256xf32>
    %16 = math.log %10 : vector<2x1x256xf32>
    %17 = arith.subf %15, %16 : vector<2x1x256xf32>
    %c0_5 = arith.constant 0 : index
    %c0_6 = arith.constant 0 : index
    %c0_7 = arith.constant 0 : index
    %18 = vector.load %arg4[%c0_5, %c0_6, %c0_7] : memref<2x1x256xf32, #tpu.memory_space<vmem>>, vector<2x1x256xf32>
    %19 = arith.addf %18, %17 : vector<2x1x256xf32>
    %c0_8 = arith.constant 0 : index
    %c0_9 = arith.constant 0 : index
    %c0_10 = arith.constant 0 : index
    %20 = vector.load %arg4[%c0_8, %c0_9, %c0_10] : memref<2x1x256xf32, #tpu.memory_space<vmem>>, vector<2x1x256xf32>
    tpu.vector_store %arg4[%c0_8, %c0_9, %c0_10], %19 {strides = array<i32>} : memref<2x1x256xf32, #tpu.memory_space<vmem>>, vector<2x1x256xf32>,
    %c0_i32_11 = arith.constant 0 : i32
    %21 = arith.cmpi eq, %arg1, %c0_i32_11 : i32
    %22 = arith.extui %21 : i1 to i32
    %c0_i32_12 = arith.constant 0 : i32
    %23 = arith.cmpi ne, %22, %c0_i32_12 : i32
    scf.if %23 {
      %c0_13 = arith.constant 0 : index
      %c0_14 = arith.constant 0 : index
      %c0_15 = arith.constant 0 : index
      %24 = vector.load %arg4[%c0_13, %c0_14, %c0_15] : memref<2x1x256xf32, #tpu.memory_space<vmem>>, vector<2x1x256xf32>
      %25 = vector.shape_cast %24 : vector<2x1x256xf32> to vector<1x2x1x256xf32>
      %cst_16 = arith.constant dense<0.000000e+00> : vector<1xf32>
      %26 = vector.multi_reduction <add>, %25, %cst_16 [1, 2, 3] : vector<1x2x1x256xf32> to vector<1xf32>
      %27 = vector.shape_cast %26 : vector<1xf32> to vector<1x1x1x1xf32>
      %28 = vector.extract %27[0, 0, 0, 0] : f32 from vector<1x1x1x1xf32>
      %29 = vector.broadcast %28 : f32 to vector<1x8x128xf32>
      %c0_17 = arith.constant 0 : index
      %c0_18 = arith.constant 0 : index
      %c0_19 = arith.constant 0 : index
      %30 = vector.load %arg3[%c0_17, %c0_18, %c0_19] : memref<1x8x128xf32, #tpu.memory_space<vmem>>, vector<1x8x128xf32>
      tpu.vector_store %arg3[%c0_17, %c0_18, %c0_19], %29 {strides = array<i32>} : memref<1x8x128xf32, #tpu.memory_space<vmem>>, vector<1x8x128xf32>,
    } else {
    }
    return
  }
  func.func @transform_0(%arg0: i32, %arg1: i32) -> (i32, i32, i32) {
    %c0_i32 = arith.constant 0 : i32
    %c0_i32_0 = arith.constant 0 : i32
    return %arg0, %c0_i32, %arg1 : i32, i32, i32
  }
  func.func @transform_1(%arg0: i32, %arg1: i32) -> (i32, i32, i32) {
    %c0_i32 = arith.constant 0 : i32
    %c0_i32_0 = arith.constant 0 : i32
    %c0_i32_1 = arith.constant 0 : i32
    return %arg0, %c0_i32, %c0_i32_0 : i32, i32, i32
  }
}

</mosaic_0001>

<llo_original>
// kernel: tpu_custom_call.1
$region0: #{tpu_custom_call.1}
  #allocation0 [shape = 'u32[]', space=smem, size = 0x4, offset = 0x4, fixed_abs, tag = 'smem constant byte address 0x4 - core index']
  #allocation1 [shape = 'u32[72,128]{1,0:T(1,128)}', space=vmem, size = 0x9000, scoped, tag = 'internal scratch']
  #allocation2 [shape = 'f32[2,1,256]{2,1,0:T(1,128)}', space=vmem, size = 0x800, scoped, tag = 'scratch operand']
  %s0 = inlined_call_operand.hbm [shape: f32[2,4,256], index: 0, kind: input, shape index: {}]
  %s1 = inlined_call_operand.hbm [shape: f32[1,8,128], index: 1, kind: output, shape index: {}]
  %s2 = sld [smem:[#allocation0]]
  $region26: #{tpu_custom_call.1} parent=0
    _
  %s4 = ssub.s32 1, %s2
  %s5 = scalar_select 0, %s4, %s2
  $region1: #{tpu_custom_call.1} parent=0
    #allocation3 [shape = 'u8[8192]{0}', space=vmem, size = 0x2000, scoped, tag = 'input window, operand 0, single buffered']
    #allocation4 [shape = 's32[1]{0}', space=sflag, size = 0x4, scoped, tag = 'scoped memory for tpu_custom_call.1']
    #allocation5 [shape = 's32[1]{0}', space=sflag, size = 0x4, scoped, tag = 'scoped memory for tpu_custom_call.1']
    #allocation6 [shape = 'u8[4096]{0}', space=vmem, size = 0x1000, scoped, tag = 'output window, operand 0, single buffered']
    %6 = vsyncpa [#allocation4], 0
    %7 = vsyncpa [#allocation5], 0
    // Predicated region
    $region2: #{tpu_custom_call.1} parent=1 // pred_check
      _
    $region3: #{tpu_custom_call.1} parent=1 // pred_check_branch
      %9 = sbr.rel (0) target = $region5
    $region4: #{tpu_custom_call.1} parent=1 // pred_region
      %11 = vsyncadd [#allocation4], 0
      %s12 = sshll.u32 %s0, 4
      %s13 = int_to_ptr.hbm [resolvable:$true] %s12
      %s14 = sshll.u32 [#allocation3], 4
      %s15 = int_to_ptr.vmem [resolvable:$true] %s14
      %20 = dma.hbm_to_vmem [thread:$0]  %s13, 256, %s15, [#allocation4], 128, 128, 8
    $region5: #{tpu_custom_call.1} parent=1 // pred_fallthru
      _
    // Predicated region
    $region6: #{tpu_custom_call.1} parent=1 // pred_check
      _
    $region7: #{tpu_custom_call.1} parent=1 // pred_check_branch
      %22 = sbr.rel (0) target = $region9
    $region8: #{tpu_custom_call.1} parent=1 // pred_region
      %24 = dma.done [#allocation4], 256
    $region9: #{tpu_custom_call.1} parent=1 // pred_fallthru
      _
    %p25 = scmp.eq.s32.totalorder 0, 0
    // Predicated region
    $region10: #{tpu_custom_call.1} parent=1 // pred_check
      %p26 = pneg %p25
    $region11: #{tpu_custom_call.1} parent=1 // pred_check_branch
      %28 = sbr.rel (%p26) target = $region13
    $region12: #{tpu_custom_call.1} parent=1 // pred_region
      %v29 = vlaneseq
      %vm30 = vcmp.ge.s32.totalorder %v29, 0
      %vm31 = vcmp.lt.s32.totalorder %v29, 256
      %vm32 = vmand %vm30, %vm31
      %33 = vst.msk [vmem:[#allocation2] sm:$0x3] %vm32, 0.0
      %34 = vst.msk [vmem:[#allocation2 + $0x2] sm:$0x3] %vm32, 0.0
    $region13: #{tpu_custom_call.1} parent=1 // pred_fallthru
      _
    %v35 = vld [vmem:[#allocation3] sm:$0xff]
    %v36 = vld [vmem:[#allocation3 + $0x8] sm:$0xff]
    %39 = vst [vmem:[#allocation1] ss:$2 sm:$0xff] %v35
    %v40 = vld.sshfl [vmem:[#allocation1] sm:$0xff pattern:$0x75316420]
    %v41 = vld.sshfl [vmem:[#allocation1 + $0x8] sm:$0xff pattern:$0x75316420]
    %s42 = scalar_lea.vmem [#allocation1], 16
    %43 = vst [vmem:[%s42] ss:$2 sm:$0xff] %v36
    %v44 = vld.sshfl [vmem:[#allocation1 + $0x10] sm:$0xff pattern:$0x75316420]
    %v45 = vld.sshfl [vmem:[#allocation1 + $0x18] sm:$0xff pattern:$0x75316420]
    %vm50 = vcmask 1043456
    %v51 = vsel %vm50, %v40, -inf
    %v52 = vrot.slane %v51, 4
    %v53 = vmax.f32 %v51, %v52
    %v54 = vrot.slane %v53, 2
    %v55 = vmax.f32 %v53, %v54
    %v56 = vrot.slane %v55, 1
    %v57 = vmax.f32 %v55, %v56
    %v58 = vsel %vm50, %v41, -inf
    %v59 = vrot.slane %v58, 4
    %v60 = vmax.f32 %v58, %v59
    %v61 = vrot.slane %v60, 2
    %v62 = vmax.f32 %v60, %v61
    %v63 = vrot.slane %v62, 1
    %v64 = vmax.f32 %v62, %v63
    %v65 = vsel %vm50, %v44, -inf
    %v66 = vrot.slane %v65, 4
    %v67 = vmax.f32 %v65, %v66
    %v68 = vrot.slane %v67, 2
    %v69 = vmax.f32 %v67, %v68
    %v70 = vrot.slane %v69, 1
    %v71 = vmax.f32 %v69, %v70
    %v72 = vsel %vm50, %v45, -inf
    %v73 = vrot.slane %v72, 4
    %v74 = vmax.f32 %v72, %v73
    %v75 = vrot.slane %v74, 2
    %v76 = vmax.f32 %v74, %v75
    %v77 = vrot.slane %v76, 1
    %v78 = vmax.f32 %v76, %v77
    %v83 = vrot.slane %v64, 4
    %v84 = vrot.slane %v78, 4
    %v85 = vsel %vm50, %v57, %v83
    %v86 = vsel %vm50, %v71, %v84
    %v89 = vsub.f32 %v35, %v85
    %v90 = vsub.f32 %v36, %v86
    %v91 = vmul.f32 %v89, 1.442695
    %v92 = vpow.pop %v91
    %v93 = vmul.f32 %v90, 1.442695
    %v94 = vpow.pop %v93
    %97 = vst [vmem:[#allocation1] ss:$2 sm:$0xff] %v92
    %v98 = vld.sshfl [vmem:[#allocation1] sm:$0xff pattern:$0x75316420]
    %v99 = vld.sshfl [vmem:[#allocation1 + $0x8] sm:$0xff pattern:$0x75316420]
    %s100 = scalar_lea.vmem [#allocation1], 16
    %101 = vst [vmem:[%s100] ss:$2 sm:$0xff] %v94
    %v102 = vld.sshfl [vmem:[#allocation1 + $0x10] sm:$0xff pattern:$0x75316420]
    %v103 = vld.sshfl [vmem:[#allocation1 + $0x18] sm:$0xff pattern:$0x75316420]
    %v108 = vsel %vm50, %v98, 0.0
    %v109 = vrot.slane %v108, 4
    %v110 = vadd.f32 %v108, %v109
    %v111 = vrot.slane %v110, 2
    %v112 = vadd.f32 %v110, %v111
    %v113 = vrot.slane %v112, 1
    %v114 = vadd.f32 %v112, %v113
    %v115 = vsel %vm50, %v99, 0.0
    %v116 = vrot.slane %v115, 4
    %v117 = vadd.f32 %v115, %v116
    %v118 = vrot.slane %v117, 2
    %v119 = vadd.f32 %v117, %v118
    %v120 = vrot.slane %v119, 1
    %v121 = vadd.f32 %v119, %v120
    %v122 = vsel %vm50, %v102, 0.0
    %v123 = vrot.slane %v122, 4
    %v124 = vadd.f32 %v122, %v123
    %v125 = vrot.slane %v124, 2
    %v126 = vadd.f32 %v124, %v125
    %v127 = vrot.slane %v126, 1
    %v128 = vadd.f32 %v126, %v127
    %v129 = vsel %vm50, %v103, 0.0
    %v130 = vrot.slane %v129, 4
    %v131 = vadd.f32 %v129, %v130
    %v132 = vrot.slane %v131, 2
    %v133 = vadd.f32 %v131, %v132
    %v134 = vrot.slane %v133, 1
    %v135 = vadd.f32 %v133, %v134
    %v136 = vmul.f32 %v92, %v89
    %v137 = vmul.f32 %v94, %v90
    %140 = vst [vmem:[#allocation1] ss:$2 sm:$0xff] %v136
    %v141 = vld.sshfl [vmem:[#allocation1] sm:$0xff pattern:$0x75316420]
    %v142 = vld.sshfl [vmem:[#allocation1 + $0x8] sm:$0xff pattern:$0x75316420]
    %s143 = scalar_lea.vmem [#allocation1], 16
    %144 = vst [vmem:[%s143] ss:$2 sm:$0xff] %v137
    %v145 = vld.sshfl [vmem:[#allocation1 + $0x10] sm:$0xff pattern:$0x75316420]
    %v146 = vld.sshfl [vmem:[#allocation1 + $0x18] sm:$0xff pattern:$0x75316420]
    %v151 = vsel %vm50, %v141, 0.0
    %v152 = vrot.slane %v151, 4
    %v153 = vadd.f32 %v151, %v152
    %v154 = vrot.slane %v153, 2
    %v155 = vadd.f32 %v153, %v154
    %v156 = vrot.slane %v155, 1
    %v157 = vadd.f32 %v155, %v156
    %v158 = vsel %vm50, %v142, 0.0
    %v159 = vrot.slane %v158, 4
    %v160 = vadd.f32 %v158, %v159
    %v161 = vrot.slane %v160, 2
    %v162 = vadd.f32 %v160, %v161
    %v163 = vrot.slane %v162, 1
    %v164 = vadd.f32 %v162, %v163
    %v165 = vsel %vm50, %v145, 0.0
    %v166 = vrot.slane %v165, 4
    %v167 = vadd.f32 %v165, %v166
    %v168 = vrot.slane %v167, 2
    %v169 = vadd.f32 %v167, %v168
    %v170 = vrot.slane %v169, 1
    %v171 = vadd.f32 %v169, %v170
    %v172 = vsel %vm50, %v146, 0.0
    %v173 = vrot.slane %v172, 4
    %v174 = vadd.f32 %v172, %v173
    %v175 = vrot.slane %v174, 2
    %v176 = vadd.f32 %v174, %v175
    %v177 = vrot.slane %v176, 1
    %v178 = vadd.f32 %v176, %v177
    %v179 = vrcp.pop %v114
    %v180 = vrcp.pop %v121
    %v181 = vrcp.pop %v128
    %v182 = vrcp.pop %v135
    %v183 = vmul.f32 %v157, %v179
    %v184 = vmul.f32 %v164, %v180
    %v185 = vmul.f32 %v171, %v181
    %v186 = vmul.f32 %v178, %v182
    %v187 = vlog2.pop %v114
    %v188 = vmul.f32 %v187, 0.6931472
    %v189 = vlog2.pop %v121
    %v190 = vmul.f32 %v189, 0.6931472
    %v191 = vlog2.pop %v128
    %v192 = vmul.f32 %v191, 0.6931472
    %v193 = vlog2.pop %v135
    %v194 = vmul.f32 %v193, 0.6931472
    %v195 = vsub.f32 %v183, %v188
    %v196 = vsub.f32 %v184, %v190
    %v197 = vsub.f32 %v185, %v192
    %v198 = vsub.f32 %v186, %v194
    %v199 = vld [vmem:[#allocation2] sm:$0x3]
    %v200 = vld [vmem:[#allocation2 + $0x2] sm:$0x3]
    %v205 = vrot.slane %v196, 7
    %v206 = vrot.slane %v198, 7
    %vm207 = vcmask 1040384
    %v208 = vsel %vm207, %v195, %v205
    %v209 = vsel %vm207, %v197, %v206
    %v212 = vadd.f32 %v199, %v208
    %v213 = vadd.f32 %v200, %v209
    %v214 = vlaneseq
    %vm215 = vcmp.ge.s32.totalorder %v214, 0
    %vm216 = vcmp.lt.s32.totalorder %v214, 256
    %vm217 = vmand %vm215, %vm216
    %218 = vst.msk [vmem:[#allocation2] sm:$0x3] %vm217, %v212
    %219 = vst.msk [vmem:[#allocation2 + $0x2] sm:$0x3] %vm217, %v213
    // Predicated region
    $region14: #{tpu_custom_call.1} parent=1 // pred_check
      %p220 = pneg %p25
    $region15: #{tpu_custom_call.1} parent=1 // pred_check_branch
      %222 = sbr.rel (%p220) target = $region17
    $region16: #{tpu_custom_call.1} parent=1 // pred_region
      %v223 = vld [vmem:[#allocation2] sm:$0x3]
      %v224 = vld [vmem:[#allocation2 + $0x2] sm:$0x3]
      %v227 = vperm.slane %v223, 0
      %v228 = vperm.slane %v223, 1
      %v229 = vperm.slane %v224, 0
      %v230 = vperm.slane %v224, 1
      %v235 = vsel %vm207, %v227, 0.0
      %v236 = vsel %vm207, %v228, 0.0
      %v237 = vadd.f32 %v235, %v236
      %v238 = vsel %vm207, %v229, 0.0
      %v239 = vadd.f32 %v237, %v238
      %v240 = vsel %vm207, %v230, 0.0
      %v241 = vadd.f32 %v239, %v240
      %242 = vadd.xlane.f32.xlu0 %v241
      %v243 = vpop.xlane.xlu0 %242
      %v244 = vrot.slane %v243, 4
      %v245 = vadd.f32 %v243, %v244
      %v246 = vrot.slane %v245, 2
      %v247 = vadd.f32 %v245, %v246
      %v248 = vrot.slane %v247, 1
      %v249 = vadd.f32 %v247, %v248
      %s250 = vtos %v249
      %v251 = vstv %s250
      %252 = vst [vmem:[#allocation6] sm:$0xff] %v251
    $region17: #{tpu_custom_call.1} parent=1 // pred_fallthru
      _
    // Predicated region
    $region18: #{tpu_custom_call.1} parent=1 // pred_check
      _
    $region19: #{tpu_custom_call.1} parent=1 // pred_check_branch
      %254 = sbr.rel (0) target = $region21
    $region20: #{tpu_custom_call.1} parent=1 // pred_region
      %256 = vsyncadd [#allocation5], 0
      %s258 = sshll.u32 [#allocation6], 4
      %s259 = int_to_ptr.vmem [resolvable:$true] %s258
      %s260 = sshll.u32 %s1, 4
      %s261 = int_to_ptr.hbm [resolvable:$true] %s260
      %263 = dma.vmem_to_hbm [thread:$0]  %s259, 128, %s261, [#allocation5]
    $region21: #{tpu_custom_call.1} parent=1 // pred_fallthru
      _
    // Predicated region
    $region22: #{tpu_custom_call.1} parent=1 // pred_check
      _
    $region23: #{tpu_custom_call.1} parent=1 // pred_check_branch
      %265 = sbr.rel (0) target = $region25
    $region24: #{tpu_custom_call.1} parent=1 // pred_region
      %267 = dma.done [#allocation5], 128
    $region25: #{tpu_custom_call.1} parent=1 // pred_fallthru
      _
    %268 = vsyncpa [#allocation4], 1
    %269 = vsyncpa [#allocation5], 1

</llo_original>
